<compile_context>
chip_gen: v7x
topology: tpu7x:2x2x1
jax: 0.10.0
libtpu: 0.0.40
codegen_flags: <defaults>
</compile_context>

<pallas_src>
import functools

import jax
import jax.numpy as jnp
from jax.experimental import pallas as pl
from jax.experimental.pallas import tpu as pltpu


def _self_label_loss_kernel(*refs, num_heads, batch, threshold, is_input_prob):
    """One batch-tile grid step of ConfidenceBasedCE for all heads.

    refs layout:
      refs[0:H]        weak logits tiles,   (tb, C_h) VMEM
      refs[H:2H]       strong logits tiles, (tb, C_h) VMEM
      refs[2H]         loss_ref  (H, 128) f32 VMEM output (lane-broadcast per head)
      refs[2H+1]       count_ref (H, 128) f32 VMEM output (#selected rows per head)
      refs[2H+2]       acc_ce    (H, tb, 1) f32 VMEM scratch (masked-CE column sums)
      refs[2H+3]       acc_mk    (H, tb, 1) f32 VMEM scratch (mask column sums)
    """
    weak_refs = refs[:num_heads]
    strong_refs = refs[num_heads:2 * num_heads]
    loss_ref = refs[2 * num_heads]
    count_ref = refs[2 * num_heads + 1]
    acc_ce = refs[2 * num_heads + 2]
    acc_mk = refs[2 * num_heads + 3]

    b = pl.program_id(0)
    nb = pl.num_programs(0)
    tb = weak_refs[0].shape[0]

    @pl.when(b == 0)
    def _init():
        acc_ce[...] = jnp.zeros_like(acc_ce)
        acc_mk[...] = jnp.zeros_like(acc_mk)

    # Row-validity mask only when the batch is not an exact multiple of the tile
    # (ragged last tile: OOB rows carry unspecified data and must be excluded).
    if (batch % tb) != 0:
        row = jax.lax.broadcasted_iota(jnp.int32, (tb, 1), 0) + b * tb
        valid = row < batch
    else:
        valid = None

    # maxprob > thr  <=>  sum(exp(weak - wmax)) < 1/thr   (no reciprocal per row)
    inv_thr = (1.0 / threshold) if ((not is_input_prob) and threshold > 0.0) else None

    iota_cache = {}  # hoist broadcasted_iota per distinct channel count (no CSE in JAX)

    for h in range(num_heads):
        weak = weak_refs[h][...]       # (tb, C_h), native dtype
        strong = strong_refs[h][...]   # (tb, C_h), native dtype
        tb_h, c_h = weak.shape
        if c_h not in iota_cache:
            iota_cache[c_h] = jax.lax.broadcasted_iota(jnp.int32, (tb_h, c_h), 1)
        lane_iota = iota_cache[c_h]

        # --- weak view: pseudo-label (first-max index, matches torch.max) + confidence ---
        wmax = jnp.max(weak, axis=1, keepdims=True)                            # (tb, 1)
        target = jnp.min(jnp.where(weak == wmax, lane_iota, c_h),
                         axis=1, keepdims=True)                                # (tb, 1)
        if is_input_prob:
            conf = wmax.astype(jnp.float32) > jnp.float32(threshold)
        elif inv_thr is not None:
            wsum = jnp.sum(jnp.exp((weak - wmax).astype(jnp.float32)),
                           axis=1, keepdims=True)
            conf = wsum < jnp.float32(inv_thr)
        else:
            # threshold <= 0 with logits: softmax max prob is always > 0.
            conf = jnp.ones((tb_h, 1), dtype=jnp.bool_)

        mask = conf if valid is None else jnp.logical_and(conf, valid)         # (tb, 1)

        # --- strong view: CE at target without materializing log-softmax ---
        smax = jnp.max(strong, axis=1, keepdims=True)
        sshift = (strong - smax).astype(jnp.float32)                           # (tb, C)
        lse = jnp.log(jnp.sum(jnp.exp(sshift), axis=1, keepdims=True))         # (tb, 1)
        sel = jnp.sum(jnp.where(lane_iota == target, sshift, 0.0),
                      axis=1, keepdims=True)                                   # (tb, 1)
        ce = lse - sel                                                         # (tb, 1)

        # Accumulate per-row columns (VPU adds); scalar reduce only at finalize.
        acc_ce[h] = acc_ce[h] + jnp.where(mask, ce, 0.0)
        acc_mk[h] = acc_mk[h] + mask.astype(jnp.float32)

    @pl.when(b == nb - 1)
    def _finalize():
        for h in range(num_heads):
            s = jnp.sum(acc_ce[h])
            n = jnp.sum(acc_mk[h])
            loss_ref[pl.ds(h, 1), :] = jnp.full((1, 128), s / n, jnp.float32)
            count_ref[pl.ds(h, 1), :] = jnp.full((1, 128), n, jnp.float32)


def _choose_batch_tile(batch, head_dims, max_tile_rows=None):
    """Pick the batch tile: ~2 MiB per input buffer, ~12 MiB total in-flight state,
    capped at 512 rows, multiple of 8 (f32) / 16 (sub-32-bit) when the batch is tiled.

    head_dims: list of (channels, itemsize) per head (weak and strong share shapes).
    """
    sub = 8 if all(isz >= 4 for _, isz in head_dims) else 16
    max_row_bytes = max(c * isz for c, isz in head_dims)
    # Per tile row: 2 views x 2 pipeline buffers per head + 2 lane-padded f32 acc rows.
    per_row = sum(2 * 2 * c * isz + 2 * 128 * 4 for c, isz in head_dims)
    rows_by_buf = (2 * 1024 * 1024) // max(max_row_bytes, 1)
    rows_by_total = (12 * 1024 * 1024) // max(per_row, 1)
    cap = max(min(512, rows_by_buf, rows_by_total), sub)
    if max_tile_rows is not None:
        cap = max(min(cap, max_tile_rows), sub)
    if batch <= cap:
        return batch          # single full-batch block (exempt from 8-row divisibility)
    return max((cap // sub) * sub, sub)


def _vmem_limit_bytes(tb, head_dims):
    """Explicit scoped-VMEM request: double-buffered inputs + accumulators + outputs."""
    in_bytes = sum(2 * 2 * tb * c * isz for c, isz in head_dims)
    acc_bytes = 2 * len(head_dims) * tb * 128 * 4           # (H, tb, 1) f32, lane-padded
    out_bytes = 2 * 2 * max(len(head_dims), 8) * 128 * 4
    total = in_bytes + acc_bytes + out_bytes + 2 * 1024 * 1024   # + headroom
    return int(max(total, 16 * 1024 * 1024))


def self_label_losses(weak_list, strong_list, threshold, is_input_prob=False,
                      max_tile_rows=None):
    """Fused multi-head ConfidenceBasedCE.

    weak_list / strong_list: per-head (B, C_h) logits (or probs). Returns
    (losses[H], counts[H]) where counts[h] = #rows above the confidence threshold.
    """
    num_heads = len(weak_list)
    assert num_heads >= 1 and len(strong_list) == num_heads
    batch = weak_list[0].shape[0]
    head_dims = []
    for w, s in zip(weak_list, strong_list):
        assert w.shape == s.shape and w.ndim == 2 and w.shape[0] == batch
        head_dims.append((w.shape[1], jnp.dtype(w.dtype).itemsize))

    tb = _choose_batch_tile(batch, head_dims, max_tile_rows)
    nb = pl.cdiv(batch, tb)

    kernel = functools.partial(
        _self_label_loss_kernel,
        num_heads=num_heads,
        batch=int(batch),
        threshold=float(threshold),
        is_input_prob=bool(is_input_prob),
    )

    in_specs = ([pl.BlockSpec((tb, c), lambda b: (b, 0)) for c, _ in head_dims]
                + [pl.BlockSpec((tb, c), lambda b: (b, 0)) for c, _ in head_dims])
    out_specs = (pl.BlockSpec((num_heads, 128), lambda b: (0, 0)),
                 pl.BlockSpec((num_heads, 128), lambda b: (0, 0)))

    loss_pad, count_pad = pl.pallas_call(
        kernel,
        out_shape=(
            jax.ShapeDtypeStruct((num_heads, 128), jnp.float32),
            jax.ShapeDtypeStruct((num_heads, 128), jnp.float32),
        ),
        grid_spec=pltpu.PrefetchScalarGridSpec(
            num_scalar_prefetch=0,
            grid=(nb,),
            in_specs=in_specs,
            out_specs=out_specs,
            scratch_shapes=[
                pltpu.VMEM((num_heads, tb, 1), jnp.float32),   # sum(mask * ce) columns
                pltpu.VMEM((num_heads, tb, 1), jnp.float32),   # sum(mask) columns
            ],
        ),
        compiler_params=pltpu.CompilerParams(
            dimension_semantics=("arbitrary",),
            vmem_limit_bytes=_vmem_limit_bytes(tb, head_dims),
        ),
    )(*weak_list, *strong_list)

    return loss_pad[:, 0], count_pad[:, 0]


class SelfLabelLoss:
    """JAX/Pallas port of selfLabelLoss (forward only, weight4CE=False)."""

    def __init__(self, self_label_threshold, is_input_prob=False, check_empty_mask=False):
        self.threshold = self_label_threshold
        self.is_input_prob = is_input_prob
        # The eager ValueError of MaskedCELoss requires a host sync; it is opt-in so the
        # default path stays fully asynchronous.  With the check off, a head whose mask
        # is all zeros yields inf/NaN loss (count==0) instead of raising.
        self.check_empty_mask = check_empty_mask

    def __call__(self, anchors, auged_images):
        head_num = len(anchors.keys())
        weak = [anchors[f"eachHead_{h}"] for h in range(head_num)]
        strong = [auged_images[f"eachHead_{h}"] for h in range(head_num)]

        losses, counts = self_label_losses(weak, strong, self.threshold, self.is_input_prob)

        if self.check_empty_mask:
            counts_host = jax.device_get(counts)     # single host sync for ALL heads
            for h in range(head_num):
                if float(counts_host[h]) == 0.0:
                    raise ValueError("Mask in MaskedCrossEntropyLoss is all zeros.")

        return {f"head_{h}": losses[h] for h in range(head_num)}


def _reference_loss(weak, strong, threshold):
    """Pure-JAX reference of the same math (sanity check)."""
    wprob = jax.nn.softmax(weak.astype(jnp.float32), axis=1)
    maxprob = jnp.max(wprob, axis=1)
    target = jnp.argmax(wprob, axis=1)
    mask = maxprob > threshold
    logp = jax.nn.log_softmax(strong.astype(jnp.float32), axis=1)
    ce = -jnp.take_along_axis(logp, target[:, None], axis=1)[:, 0]
    return jnp.sum(jnp.where(mask, ce, 0.0)) / jnp.sum(mask.astype(jnp.float32))


if __name__ == "__main__":
    key = jax.random.PRNGKey(0)
    threshold = 0.05   # low threshold so the mask is non-empty for random logits

    # --- Test 1: module-style call, small shapes, single-tile path ---
    head_num, B, C = 2, 8, 32
    anchors, auged = {}, {}
    for h in range(head_num):
        key, k1, k2 = jax.random.split(key, 3)
        anchors[f"eachHead_{h}"] = jax.random.normal(k1, (B, C), dtype=jnp.float32)
        auged[f"eachHead_{h}"] = jax.random.normal(k2, (B, C), dtype=jnp.float32)

    loss_mod = SelfLabelLoss(self_label_threshold=threshold, is_input_prob=False)
    losses = loss_mod(anchors, auged)
    jax.block_until_ready(losses)

    for h in range(head_num):
        ref = _reference_loss(anchors[f"eachHead_{h}"], auged[f"eachHead_{h}"], threshold)
        got = losses[f"head_{h}"]
        assert jnp.allclose(got, ref, atol=1e-5, rtol=1e-5), (h, float(got), float(ref))

    # --- Test 2: forced multi-tile grid with ragged last tile (row-mask path) ---
    B2 = 200
    weak2, strong2 = [], []
    for h in range(head_num):
        key, k1, k2 = jax.random.split(key, 3)
        weak2.append(jax.random.normal(k1, (B2, C), dtype=jnp.float32))
        strong2.append(jax.random.normal(k2, (B2, C), dtype=jnp.float32))
    losses2, counts2 = self_label_losses(weak2, strong2, threshold, max_tile_rows=64)
    jax.block_until_ready((losses2, counts2))
    for h in range(head_num):
        ref = _reference_loss(weak2[h], strong2[h], threshold)
        assert jnp.allclose(losses2[h], ref, atol=1e-5, rtol=1e-5), \
            (h, float(losses2[h]), float(ref))

    print("KERNEL_OK")
</pallas_src>

<mosaic_0001>
module attributes {stable_mosaic.version = 11 : i64} {
  func.func @_self_label_loss_kernel(%arg0: i32, %arg1: memref<8x32xf32, #tpu.memory_space<vmem>>, %arg2: memref<8x32xf32, #tpu.memory_space<vmem>>, %arg3: memref<8x32xf32, #tpu.memory_space<vmem>>, %arg4: memref<8x32xf32, #tpu.memory_space<vmem>>, %arg5: memref<2x128xf32, #tpu.memory_space<vmem>>, %arg6: memref<2x128xf32, #tpu.memory_space<vmem>>, %arg7: memref<2x8x1xf32, #tpu.memory_space<vmem>>, %arg8: memref<2x8x1xf32, #tpu.memory_space<vmem>>) attributes {dimension_semantics = [#tpu.dimension_semantics<arbitrary>], iteration_bounds = array<i64: 1>, scalar_prefetch = 0 : i64, scratch_operands = 2 : i64, tpu.core_type = #tpu.core_type<tc>, window_params = [{transform_indices = @transform_0, window_bounds = array<i64: 8, 32>}, {transform_indices = @transform_1, window_bounds = array<i64: 8, 32>}, {transform_indices = @transform_2, window_bounds = array<i64: 8, 32>}, {transform_indices = @transform_3, window_bounds = array<i64: 8, 32>}, {pipeline_mode = #tpu.pipeline_mode<synchronous>, transform_indices = @transform_4, window_bounds = array<i64: 2, 128>}, {pipeline_mode = #tpu.pipeline_mode<synchronous>, transform_indices = @transform_5, window_bounds = array<i64: 2, 128>}]} {
    %c0_i32 = arith.constant 0 : i32
    %0 = arith.cmpi eq, %arg0, %c0_i32 : i32
    %1 = arith.extui %0 : i1 to i32
    %c0_i32_0 = arith.constant 0 : i32
    %2 = arith.cmpi ne, %1, %c0_i32_0 : i32
    scf.if %2 {
      %cst_51 = arith.constant 0.000000e+00 : f32
      %103 = vector.broadcast %cst_51 : f32 to vector<2x8x1xf32>
      %c0_52 = arith.constant 0 : index
      %c0_53 = arith.constant 0 : index
      %c0_54 = arith.constant 0 : index
      %104 = vector.load %arg7[%c0_52, %c0_53, %c0_54] : memref<2x8x1xf32, #tpu.memory_space<vmem>>, vector<2x8x1xf32>
      tpu.vector_store %arg7[%c0_52, %c0_53, %c0_54], %103 {strides = array<i32>} : memref<2x8x1xf32, #tpu.memory_space<vmem>>, vector<2x8x1xf32>,
      %cst_55 = arith.constant 0.000000e+00 : f32
      %105 = vector.broadcast %cst_55 : f32 to vector<2x8x1xf32>
      %c0_56 = arith.constant 0 : index
      %c0_57 = arith.constant 0 : index
      %c0_58 = arith.constant 0 : index
      %106 = vector.load %arg8[%c0_56, %c0_57, %c0_58] : memref<2x8x1xf32, #tpu.memory_space<vmem>>, vector<2x8x1xf32>
      tpu.vector_store %arg8[%c0_56, %c0_57, %c0_58], %105 {strides = array<i32>} : memref<2x8x1xf32, #tpu.memory_space<vmem>>, vector<2x8x1xf32>,
    } else {
    }
    %c0 = arith.constant 0 : index
    %c0_1 = arith.constant 0 : index
    %3 = vector.load %arg1[%c0, %c0_1] : memref<8x32xf32, #tpu.memory_space<vmem>>, vector<8x32xf32>
    %c0_2 = arith.constant 0 : index
    %c0_3 = arith.constant 0 : index
    %4 = vector.load %arg3[%c0_2, %c0_3] : memref<8x32xf32, #tpu.memory_space<vmem>>, vector<8x32xf32>
    %5 = tpu.iota {dimensions = array<i32: 1>} : vector<8x32xi32>
    %cst = arith.constant dense<0xFF800000> : vector<8xf32>
    %6 = vector.multi_reduction <maximumf>, %3, %cst [1] : vector<8x32xf32> to vector<8xf32>
    %7 = vector.shape_cast %6 : vector<8xf32> to vector<8x1xf32>
    %8 = vector.broadcast %7 : vector<8x1xf32> to vector<8x32xf32>
    %9 = arith.cmpf oeq, %3, %8 : vector<8x32xf32>
    %c32_i32 = arith.constant 32 : i32
    %10 = vector.broadcast %c32_i32 : i32 to vector<8x32xi32>
    %11 = arith.select %9, %5, %10 : vector<8x32xi1>, vector<8x32xi32>
    %cst_4 = arith.constant dense<2147483647> : vector<8xi32>
    %12 = vector.multi_reduction <minsi>, %11, %cst_4 [1] : vector<8x32xi32> to vector<8xi32>
    %13 = vector.shape_cast %12 : vector<8xi32> to vector<8x1xi32>
    %14 = vector.broadcast %7 : vector<8x1xf32> to vector<8x32xf32>
    %15 = arith.subf %3, %14 : vector<8x32xf32>
    %16 = math.exp %15 : vector<8x32xf32>
    %cst_5 = arith.constant dense<0.000000e+00> : vector<8xf32>
    %17 = vector.multi_reduction <add>, %16, %cst_5 [1] : vector<8x32xf32> to vector<8xf32>
    %18 = vector.shape_cast %17 : vector<8xf32> to vector<8x1xf32>
    %cst_6 = arith.constant 2.000000e+01 : f32
    %19 = vector.broadcast %cst_6 : f32 to vector<8x1xf32>
    %20 = arith.cmpf olt, %18, %19 : vector<8x1xf32>
    %cst_7 = arith.constant dense<0xFF800000> : vector<8xf32>
    %21 = vector.multi_reduction <maximumf>, %4, %cst_7 [1] : vector<8x32xf32> to vector<8xf32>
    %22 = vector.shape_cast %21 : vector<8xf32> to vector<8x1xf32>
    %23 = vector.broadcast %22 : vector<8x1xf32> to vector<8x32xf32>
    %24 = arith.subf %4, %23 : vector<8x32xf32>
    %25 = math.exp %24 : vector<8x32xf32>
    %cst_8 = arith.constant dense<0.000000e+00> : vector<8xf32>
    %26 = vector.multi_reduction <add>, %25, %cst_8 [1] : vector<8x32xf32> to vector<8xf32>
    %27 = vector.shape_cast %26 : vector<8xf32> to vector<8x1xf32>
    %28 = math.log %27 : vector<8x1xf32>
    %29 = vector.broadcast %13 : vector<8x1xi32> to vector<8x32xi32>
    %30 = arith.cmpi eq, %5, %29 : vector<8x32xi32>
    %cst_9 = arith.constant 0.000000e+00 : f32
    %31 = vector.broadcast %cst_9 : f32 to vector<8x32xf32>
    %32 = arith.select %30, %24, %31 : vector<8x32xi1>, vector<8x32xf32>
    %cst_10 = arith.constant dense<0.000000e+00> : vector<8xf32>
    %33 = vector.multi_reduction <add>, %32, %cst_10 [1] : vector<8x32xf32> to vector<8xf32>
    %34 = vector.shape_cast %33 : vector<8xf32> to vector<8x1xf32>
    %35 = arith.subf %28, %34 : vector<8x1xf32>
    %c0_11 = arith.constant 0 : index
    %c0_12 = arith.constant 0 : index
    %c0_13 = arith.constant 0 : index
    %36 = vector.load %arg7[%c0_11, %c0_12, %c0_13] : memref<2x8x1xf32, #tpu.memory_space<vmem>>, vector<1x8x1xf32>
    %37 = vector.shape_cast %36 : vector<1x8x1xf32> to vector<8x1xf32>
    %cst_14 = arith.constant 0.000000e+00 : f32
    %38 = vector.broadcast %cst_14 : f32 to vector<8x1xf32>
    %39 = arith.select %20, %35, %38 : vector<8x1xi1>, vector<8x1xf32>
    %40 = arith.addf %37, %39 : vector<8x1xf32>
    %c0_15 = arith.constant 0 : index
    %c0_16 = arith.constant 0 : index
    %c0_17 = arith.constant 0 : index
    %41 = vector.load %arg7[%c0_15, %c0_16, %c0_17] : memref<2x8x1xf32, #tpu.memory_space<vmem>>, vector<1x8x1xf32>
    %42 = vector.shape_cast %41 : vector<1x8x1xf32> to vector<8x1xf32>
    %43 = vector.shape_cast %40 : vector<8x1xf32> to vector<1x8x1xf32>
    tpu.vector_store %arg7[%c0_15, %c0_16, %c0_17], %43 {strides = array<i32>} : memref<2x8x1xf32, #tpu.memory_space<vmem>>, vector<1x8x1xf32>,
    %c0_18 = arith.constant 0 : index
    %c0_19 = arith.constant 0 : index
    %c0_20 = arith.constant 0 : index
    %44 = vector.load %arg8[%c0_18, %c0_19, %c0_20] : memref<2x8x1xf32, #tpu.memory_space<vmem>>, vector<1x8x1xf32>
    %45 = vector.shape_cast %44 : vector<1x8x1xf32> to vector<8x1xf32>
    %46 = arith.extui %20 : vector<8x1xi1> to vector<8x1xi32>
    %47 = arith.sitofp %46 : vector<8x1xi32> to vector<8x1xf32>
    %48 = arith.addf %45, %47 : vector<8x1xf32>
    %c0_21 = arith.constant 0 : index
    %c0_22 = arith.constant 0 : index
    %c0_23 = arith.constant 0 : index
    %49 = vector.load %arg8[%c0_21, %c0_22, %c0_23] : memref<2x8x1xf32, #tpu.memory_space<vmem>>, vector<1x8x1xf32>
    %50 = vector.shape_cast %49 : vector<1x8x1xf32> to vector<8x1xf32>
    %51 = vector.shape_cast %48 : vector<8x1xf32> to vector<1x8x1xf32>
    tpu.vector_store %arg8[%c0_21, %c0_22, %c0_23], %51 {strides = array<i32>} : memref<2x8x1xf32, #tpu.memory_space<vmem>>, vector<1x8x1xf32>,
    %c0_24 = arith.constant 0 : index
    %c0_25 = arith.constant 0 : index
    %52 = vector.load %arg2[%c0_24, %c0_25] : memref<8x32xf32, #tpu.memory_space<vmem>>, vector<8x32xf32>
    %c0_26 = arith.constant 0 : index
    %c0_27 = arith.constant 0 : index
    %53 = vector.load %arg4[%c0_26, %c0_27] : memref<8x32xf32, #tpu.memory_space<vmem>>, vector<8x32xf32>
    %cst_28 = arith.constant dense<0xFF800000> : vector<8xf32>
    %54 = vector.multi_reduction <maximumf>, %52, %cst_28 [1] : vector<8x32xf32> to vector<8xf32>
    %55 = vector.shape_cast %54 : vector<8xf32> to vector<8x1xf32>
    %56 = vector.broadcast %55 : vector<8x1xf32> to vector<8x32xf32>
    %57 = arith.cmpf oeq, %52, %56 : vector<8x32xf32>
    %c32_i32_29 = arith.constant 32 : i32
    %58 = vector.broadcast %c32_i32_29 : i32 to vector<8x32xi32>
    %59 = arith.select %57, %5, %58 : vector<8x32xi1>, vector<8x32xi32>
    %cst_30 = arith.constant dense<2147483647> : vector<8xi32>
    %60 = vector.multi_reduction <minsi>, %59, %cst_30 [1] : vector<8x32xi32> to vector<8xi32>
    %61 = vector.shape_cast %60 : vector<8xi32> to vector<8x1xi32>
    %62 = vector.broadcast %55 : vector<8x1xf32> to vector<8x32xf32>
    %63 = arith.subf %52, %62 : vector<8x32xf32>
    %64 = math.exp %63 : vector<8x32xf32>
    %cst_31 = arith.constant dense<0.000000e+00> : vector<8xf32>
    %65 = vector.multi_reduction <add>, %64, %cst_31 [1] : vector<8x32xf32> to vector<8xf32>
    %66 = vector.shape_cast %65 : vector<8xf32> to vector<8x1xf32>
    %cst_32 = arith.constant 2.000000e+01 : f32
    %67 = vector.broadcast %cst_32 : f32 to vector<8x1xf32>
    %68 = arith.cmpf olt, %66, %67 : vector<8x1xf32>
    %cst_33 = arith.constant dense<0xFF800000> : vector<8xf32>
    %69 = vector.multi_reduction <maximumf>, %53, %cst_33 [1] : vector<8x32xf32> to vector<8xf32>
    %70 = vector.shape_cast %69 : vector<8xf32> to vector<8x1xf32>
    %71 = vector.broadcast %70 : vector<8x1xf32> to vector<8x32xf32>
    %72 = arith.subf %53, %71 : vector<8x32xf32>
    %73 = math.exp %72 : vector<8x32xf32>
    %cst_34 = arith.constant dense<0.000000e+00> : vector<8xf32>
    %74 = vector.multi_reduction <add>, %73, %cst_34 [1] : vector<8x32xf32> to vector<8xf32>
    %75 = vector.shape_cast %74 : vector<8xf32> to vector<8x1xf32>
    %76 = math.log %75 : vector<8x1xf32>
    %77 = vector.broadcast %61 : vector<8x1xi32> to vector<8x32xi32>
    %78 = arith.cmpi eq, %5, %77 : vector<8x32xi32>
    %cst_35 = arith.constant 0.000000e+00 : f32
    %79 = vector.broadcast %cst_35 : f32 to vector<8x32xf32>
    %80 = arith.select %78, %72, %79 : vector<8x32xi1>, vector<8x32xf32>
    %cst_36 = arith.constant dense<0.000000e+00> : vector<8xf32>
    %81 = vector.multi_reduction <add>, %80, %cst_36 [1] : vector<8x32xf32> to vector<8xf32>
    %82 = vector.shape_cast %81 : vector<8xf32> to vector<8x1xf32>
    %83 = arith.subf %76, %82 : vector<8x1xf32>
    %c1 = arith.constant 1 : index
    %c0_37 = arith.constant 0 : index
    %c0_38 = arith.constant 0 : index
    %84 = vector.load %arg7[%c1, %c0_37, %c0_38] : memref<2x8x1xf32, #tpu.memory_space<vmem>>, vector<1x8x1xf32>
    %85 = vector.shape_cast %84 : vector<1x8x1xf32> to vector<8x1xf32>
    %cst_39 = arith.constant 0.000000e+00 : f32
    %86 = vector.broadcast %cst_39 : f32 to vector<8x1xf32>
    %87 = arith.select %68, %83, %86 : vector<8x1xi1>, vector<8x1xf32>
    %88 = arith.addf %85, %87 : vector<8x1xf32>
    %c1_40 = arith.constant 1 : index
    %c0_41 = arith.constant 0 : index
    %c0_42 = arith.constant 0 : index
    %89 = vector.load %arg7[%c1_40, %c0_41, %c0_42] : memref<2x8x1xf32, #tpu.memory_space<vmem>>, vector<1x8x1xf32>
    %90 = vector.shape_cast %89 : vector<1x8x1xf32> to vector<8x1xf32>
    %91 = vector.shape_cast %88 : vector<8x1xf32> to vector<1x8x1xf32>
    tpu.vector_store %arg7[%c1_40, %c0_41, %c0_42], %91 {strides = array<i32>} : memref<2x8x1xf32, #tpu.memory_space<vmem>>, vector<1x8x1xf32>,
    %c1_43 = arith.constant 1 : index
    %c0_44 = arith.constant 0 : index
    %c0_45 = arith.constant 0 : index
    %92 = vector.load %arg8[%c1_43, %c0_44, %c0_45] : memref<2x8x1xf32, #tpu.memory_space<vmem>>, vector<1x8x1xf32>
    %93 = vector.shape_cast %92 : vector<1x8x1xf32> to vector<8x1xf32>
    %94 = arith.extui %68 : vector<8x1xi1> to vector<8x1xi32>
    %95 = arith.sitofp %94 : vector<8x1xi32> to vector<8x1xf32>
    %96 = arith.addf %93, %95 : vector<8x1xf32>
    %c1_46 = arith.constant 1 : index
    %c0_47 = arith.constant 0 : index
    %c0_48 = arith.constant 0 : index
    %97 = vector.load %arg8[%c1_46, %c0_47, %c0_48] : memref<2x8x1xf32, #tpu.memory_space<vmem>>, vector<1x8x1xf32>
    %98 = vector.shape_cast %97 : vector<1x8x1xf32> to vector<8x1xf32>
    %99 = vector.shape_cast %96 : vector<8x1xf32> to vector<1x8x1xf32>
    tpu.vector_store %arg8[%c1_46, %c0_47, %c0_48], %99 {strides = array<i32>} : memref<2x8x1xf32, #tpu.memory_space<vmem>>, vector<1x8x1xf32>,
    %c0_i32_49 = arith.constant 0 : i32
    %100 = arith.cmpi eq, %arg0, %c0_i32_49 : i32
    %101 = arith.extui %100 : i1 to i32
    %c0_i32_50 = arith.constant 0 : i32
    %102 = arith.cmpi ne, %101, %c0_i32_50 : i32
    scf.if %102 {
      %c0_51 = arith.constant 0 : index
      %c0_52 = arith.constant 0 : index
      %c0_53 = arith.constant 0 : index
      %103 = vector.load %arg7[%c0_51, %c0_52, %c0_53] : memref<2x8x1xf32, #tpu.memory_space<vmem>>, vector<1x8x1xf32>
      %104 = vector.shape_cast %103 : vector<1x8x1xf32> to vector<8x1xf32>
      %105 = vector.shape_cast %104 : vector<8x1xf32> to vector<1x8x1xf32>
      %cst_54 = arith.constant dense<0.000000e+00> : vector<1xf32>
      %106 = vector.multi_reduction <add>, %105, %cst_54 [1, 2] : vector<1x8x1xf32> to vector<1xf32>
      %107 = vector.shape_cast %106 : vector<1xf32> to vector<1x1x1xf32>
      %108 = vector.extract %107[0, 0, 0] : f32 from vector<1x1x1xf32>
      %c0_55 = arith.constant 0 : index
      %c0_56 = arith.constant 0 : index
      %c0_57 = arith.constant 0 : index
      %109 = vector.load %arg8[%c0_55, %c0_56, %c0_57] : memref<2x8x1xf32, #tpu.memory_space<vmem>>, vector<1x8x1xf32>
      %110 = vector.shape_cast %109 : vector<1x8x1xf32> to vector<8x1xf32>
      %111 = vector.shape_cast %110 : vector<8x1xf32> to vector<1x8x1xf32>
      %cst_58 = arith.constant dense<0.000000e+00> : vector<1xf32>
      %112 = vector.multi_reduction <add>, %111, %cst_58 [1, 2] : vector<1x8x1xf32> to vector<1xf32>
      %113 = vector.shape_cast %112 : vector<1xf32> to vector<1x1x1xf32>
      %114 = vector.extract %113[0, 0, 0] : f32 from vector<1x1x1xf32>
      %115 = arith.divf %108, %114 : f32
      %116 = vector.broadcast %115 : f32 to vector<1x128xf32>
      %c0_59 = arith.constant 0 : index
      %c0_60 = arith.constant 0 : index
      %117 = vector.load %arg5[%c0_59, %c0_60] : memref<2x128xf32, #tpu.memory_space<vmem>>, vector<1x128xf32>
      tpu.vector_store %arg5[%c0_59, %c0_60], %116 {strides = array<i32>} : memref<2x128xf32, #tpu.memory_space<vmem>>, vector<1x128xf32>,
      %118 = vector.broadcast %114 : f32 to vector<1x128xf32>
      %c0_61 = arith.constant 0 : index
      %c0_62 = arith.constant 0 : index
      %119 = vector.load %arg6[%c0_61, %c0_62] : memref<2x128xf32, #tpu.memory_space<vmem>>, vector<1x128xf32>
      tpu.vector_store %arg6[%c0_61, %c0_62], %118 {strides = array<i32>} : memref<2x128xf32, #tpu.memory_space<vmem>>, vector<1x128xf32>,
      %c1_63 = arith.constant 1 : index
      %c0_64 = arith.constant 0 : index
      %c0_65 = arith.constant 0 : index
      %120 = vector.load %arg7[%c1_63, %c0_64, %c0_65] : memref<2x8x1xf32, #tpu.memory_space<vmem>>, vector<1x8x1xf32>
      %121 = vector.shape_cast %120 : vector<1x8x1xf32> to vector<8x1xf32>
      %122 = vector.shape_cast %121 : vector<8x1xf32> to vector<1x8x1xf32>
      %cst_66 = arith.constant dense<0.000000e+00> : vector<1xf32>
      %123 = vector.multi_reduction <add>, %122, %cst_66 [1, 2] : vector<1x8x1xf32> to vector<1xf32>
      %124 = vector.shape_cast %123 : vector<1xf32> to vector<1x1x1xf32>
      %125 = vector.extract %124[0, 0, 0] : f32 from vector<1x1x1xf32>
      %c1_67 = arith.constant 1 : index
      %c0_68 = arith.constant 0 : index
      %c0_69 = arith.constant 0 : index
      %126 = vector.load %arg8[%c1_67, %c0_68, %c0_69] : memref<2x8x1xf32, #tpu.memory_space<vmem>>, vector<1x8x1xf32>
      %127 = vector.shape_cast %126 : vector<1x8x1xf32> to vector<8x1xf32>
      %128 = vector.shape_cast %127 : vector<8x1xf32> to vector<1x8x1xf32>
      %cst_70 = arith.constant dense<0.000000e+00> : vector<1xf32>
      %129 = vector.multi_reduction <add>, %128, %cst_70 [1, 2] : vector<1x8x1xf32> to vector<1xf32>
      %130 = vector.shape_cast %129 : vector<1xf32> to vector<1x1x1xf32>
      %131 = vector.extract %130[0, 0, 0] : f32 from vector<1x1x1xf32>
      %132 = arith.divf %125, %131 : f32
      %133 = vector.broadcast %132 : f32 to vector<1x128xf32>
      %c1_71 = arith.constant 1 : index
      %c0_72 = arith.constant 0 : index
      %134 = vector.load %arg5[%c1_71, %c0_72] : memref<2x128xf32, #tpu.memory_space<vmem>>, vector<1x128xf32>
      tpu.vector_store %arg5[%c1_71, %c0_72], %133 {strides = array<i32>} : memref<2x128xf32, #tpu.memory_space<vmem>>, vector<1x128xf32>,
      %135 = vector.broadcast %131 : f32 to vector<1x128xf32>
      %c1_73 = arith.constant 1 : index
      %c0_74 = arith.constant 0 : index
      %136 = vector.load %arg6[%c1_73, %c0_74] : memref<2x128xf32, #tpu.memory_space<vmem>>, vector<1x128xf32>
      tpu.vector_store %arg6[%c1_73, %c0_74], %135 {strides = array<i32>} : memref<2x128xf32, #tpu.memory_space<vmem>>, vector<1x128xf32>,
    } else {
    }
    return
  }
  func.func @transform_0(%arg0: i32) -> (i32, i32) {
    %c0_i32 = arith.constant 0 : i32
    %c0_i32_0 = arith.constant 0 : i32
    return %arg0, %c0_i32 : i32, i32
  }
  func.func @transform_1(%arg0: i32) -> (i32, i32) {
    %c0_i32 = arith.constant 0 : i32
    %c0_i32_0 = arith.constant 0 : i32
    return %arg0, %c0_i32 : i32, i32
  }
  func.func @transform_2(%arg0: i32) -> (i32, i32) {
    %c0_i32 = arith.constant 0 : i32
    %c0_i32_0 = arith.constant 0 : i32
    return %arg0, %c0_i32 : i32, i32
  }
  func.func @transform_3(%arg0: i32) -> (i32, i32) {
    %c0_i32 = arith.constant 0 : i32
    %c0_i32_0 = arith.constant 0 : i32
    return %arg0, %c0_i32 : i32, i32
  }
  func.func @transform_4(%arg0: i32) -> (i32, i32) {
    %c0_i32 = arith.constant 0 : i32
    %c0_i32_0 = arith.constant 0 : i32
    %c0_i32_1 = arith.constant 0 : i32
    return %c0_i32, %c0_i32_0 : i32, i32
  }
  func.func @transform_5(%arg0: i32) -> (i32, i32) {
    %c0_i32 = arith.constant 0 : i32
    %c0_i32_0 = arith.constant 0 : i32
    %c0_i32_1 = arith.constant 0 : i32
    return %c0_i32, %c0_i32_0 : i32, i32
  }
}

</mosaic_0001>

<llo_original>
// kernel: tpu_custom_call.1
$region0: #{tpu_custom_call.1}
  #allocation0 [shape = 'u32[]', space=smem, size = 0x4, offset = 0x4, fixed_abs, tag = 'smem constant byte address 0x4 - core index']
  #allocation1 [shape = 'u32[144,128]{1,0:T(1,128)}', space=vmem, size = 0x12000, scoped, tag = 'internal scratch']
  #allocation2 [shape = 'f32[2,8,1]{2,1,0:T(8,128)}', space=vmem, size = 0x2000, scoped, tag = 'scratch operand']
  #allocation3 [shape = 'f32[2,8,1]{2,1,0:T(8,128)}', space=vmem, size = 0x2000, scoped, tag = 'scratch operand']
  %s0 = inlined_call_operand.hbm [shape: f32[8,32], index: 0, kind: input, shape index: {}]
  %s1 = inlined_call_operand.hbm [shape: f32[8,32], index: 1, kind: input, shape index: {}]
  %s2 = inlined_call_operand.hbm [shape: f32[8,32], index: 2, kind: input, shape index: {}]
  %s3 = inlined_call_operand.vmem [shape: f32[8,32], index: 3, kind: input, shape index: {}]
  %s4 = inlined_call_operand.hbm [shape: f32[2,128], index: 4, kind: output, shape index: {0}]
  %s5 = inlined_call_operand.hbm [shape: f32[2,128], index: 5, kind: output, shape index: {1}]
  %6 = xla_tuple %s4, %s5
  %s7 = sld [smem:[#allocation0]]
  $region54: #{tpu_custom_call.1} parent=0
    _
  %s9 = ssub.s32 1, %s7
  %s10 = scalar_select 0, %s9, %s7
  $region1: #{tpu_custom_call.1} parent=0
    #allocation4 [shape = 'u8[4096]{0}', space=vmem, size = 0x1000, scoped, tag = 'input window, operand 0, single buffered']
    #allocation5 [shape = 's32[1]{0}', space=sflag, size = 0x4, scoped, tag = 'scoped memory for tpu_custom_call.1']
    #allocation6 [shape = 's32[1]{0}', space=sflag, size = 0x4, scoped, tag = 'scoped memory for tpu_custom_call.1']
    #allocation7 [shape = 'u8[4096]{0}', space=vmem, size = 0x1000, scoped, tag = 'input window, operand 1, single buffered']
    #allocation8 [shape = 's32[1]{0}', space=sflag, size = 0x4, scoped, tag = 'scoped memory for tpu_custom_call.1']
    #allocation9 [shape = 'u8[4096]{0}', space=vmem, size = 0x1000, scoped, tag = 'input window, operand 2, single buffered']
    #allocation10 [shape = 'u8[1024]{0}', space=vmem, size = 0x400, scoped, tag = 'output window, operand 0, single buffered']
    #allocation11 [shape = 'u8[1024]{0}', space=vmem, size = 0x400, scoped, tag = 'output window, operand 1, single buffered']
    #allocation12 [shape = 's32[1]{0}', space=sflag, size = 0x4, scoped, tag = 'scoped memory for tpu_custom_call.1']
    %11 = vsyncpa [#allocation5], 0
    %12 = vsyncpa [#allocation8], 0
    %13 = vsyncpa [#allocation6], 0
    %14 = vsyncpa [#allocation12], 0
    // Predicated region
    $region2: #{tpu_custom_call.1} parent=1 // pred_check
      _
    $region3: #{tpu_custom_call.1} parent=1 // pred_check_branch
      %16 = sbr.rel (0) target = $region5
    $region4: #{tpu_custom_call.1} parent=1 // pred_region
      %s18 = ssub.s32 128, 128
      %19 = vsyncadd [#allocation5], %s18
      %s21 = sshll.u32 [#allocation4], 4
      %s22 = int_to_ptr.vmem [resolvable:$true] %s21
      %24 = dma.hbm_to_vmem [thread:$0]  %s0, 128, %s22, [#allocation5]
    $region5: #{tpu_custom_call.1} parent=1 // pred_fallthru
      _
    // Predicated region
    $region6: #{tpu_custom_call.1} parent=1 // pred_check
      _
    $region7: #{tpu_custom_call.1} parent=1 // pred_check_branch
      %26 = sbr.rel (0) target = $region9
    $region8: #{tpu_custom_call.1} parent=1 // pred_region
      %s28 = ssub.s32 128, 128
      %29 = vsyncadd [#allocation8], %s28
      %s31 = sshll.u32 [#allocation7], 4
      %s32 = int_to_ptr.vmem [resolvable:$true] %s31
      %34 = dma.hbm_to_vmem [thread:$0]  %s1, 128, %s32, [#allocation8]
    $region9: #{tpu_custom_call.1} parent=1 // pred_fallthru
      _
    // Predicated region
    $region10: #{tpu_custom_call.1} parent=1 // pred_check
      _
    $region11: #{tpu_custom_call.1} parent=1 // pred_check_branch
      %36 = sbr.rel (0) target = $region13
    $region12: #{tpu_custom_call.1} parent=1 // pred_region
      %s38 = ssub.s32 128, 128
      %39 = vsyncadd [#allocation8], %s38
      %s41 = sshll.u32 [#allocation9], 4
      %s42 = int_to_ptr.vmem [resolvable:$true] %s41
      %44 = dma.hbm_to_vmem [thread:$0]  %s2, 128, %s42, [#allocation8]
    $region13: #{tpu_custom_call.1} parent=1 // pred_fallthru
      _
    // Predicated region
    $region14: #{tpu_custom_call.1} parent=1 // pred_check
      _
    $region15: #{tpu_custom_call.1} parent=1 // pred_check_branch
      %46 = sbr.rel (0) target = $region17
    $region16: #{tpu_custom_call.1} parent=1 // pred_region
      _
    $region17: #{tpu_custom_call.1} parent=1 // pred_fallthru
      _
    // Predicated region
    $region18: #{tpu_custom_call.1} parent=1 // pred_check
      _
    $region19: #{tpu_custom_call.1} parent=1 // pred_check_branch
      %48 = sbr.rel (0) target = $region21
    $region20: #{tpu_custom_call.1} parent=1 // pred_region
      %49 = dma.done [#allocation5], 128
    $region21: #{tpu_custom_call.1} parent=1 // pred_fallthru
      _
    // Predicated region
    $region22: #{tpu_custom_call.1} parent=1 // pred_check
      _
    $region23: #{tpu_custom_call.1} parent=1 // pred_check_branch
      %51 = sbr.rel (0) target = $region25
    $region24: #{tpu_custom_call.1} parent=1 // pred_region
      %52 = dma.done [#allocation8], 128
    $region25: #{tpu_custom_call.1} parent=1 // pred_fallthru
      _
    // Predicated region
    $region26: #{tpu_custom_call.1} parent=1 // pred_check
      _
    $region27: #{tpu_custom_call.1} parent=1 // pred_check_branch
      %54 = sbr.rel (0) target = $region29
    $region28: #{tpu_custom_call.1} parent=1 // pred_region
      %55 = dma.done [#allocation8], 128
    $region29: #{tpu_custom_call.1} parent=1 // pred_fallthru
      _
    %p56 = scmp.eq.s32.totalorder 0, 0
    // Predicated region
    $region30: #{tpu_custom_call.1} parent=1 // pred_check
      %p57 = pneg %p56
    $region31: #{tpu_custom_call.1} parent=1 // pred_check_branch
      %59 = sbr.rel (%p57) target = $region33
    $region32: #{tpu_custom_call.1} parent=1 // pred_region
      %vm60 = vcmask 7168
      %61 = vst.msk [vmem:[#allocation2] sm:$0xff] %vm60, 0.0
      %62 = vst.msk [vmem:[#allocation2 + $0x8] sm:$0xff] %vm60, 0.0
      %63 = vst.msk [vmem:[#allocation3] sm:$0xff] %vm60, 0.0
      %64 = vst.msk [vmem:[#allocation3 + $0x8] sm:$0xff] %vm60, 0.0
    $region33: #{tpu_custom_call.1} parent=1 // pred_fallthru
      _
    %v65 = vld [vmem:[#allocation4] sm:$0xff]
    %v66 = vld [vmem:[#allocation9] sm:$0xff]
    %v67 = vlaneseq
    %v68 = vand.u32 %v67, 127
    %vm69 = vcmask 261120
    %v70 = vsel %vm69, %v65, -inf
    %71 = vmax.xlane.f32.xlu0 %v70
    %v72 = vpop.xlane.xlu0 %71
    %vm73 = vcmp.eq.f32.partialorder %v65, %v72
    %v74 = vsel %vm73, %v68, 32
    %v75 = vsel %vm69, %v74, 2147483647
    %v76 = vand.u32 %v75, 65535
    %v77 = vshra.s32 %v75, 16
    %v78 = vcvt.s32.f32 %v76
    %v79 = vcvt.s32.f32 %v77
    %80 = vmin.xlane.f32.xlu0 %v79
    %v81 = vpop.xlane.xlu0 %80
    %vm82 = vcmp.eq.f32.partialorder %v79, %v81
    %v83 = vsel %vm82, %v78, inf
    %84 = vmin.xlane.f32.xlu0 %v83
    %v85 = vpop.xlane.xlu0 %84
    %v86 = vcvt.f32.s32 %v85
    %v87 = vcvt.f32.s32 %v81
    %v88 = vshll.u32 %v87, 16
    %v89 = vadd.s32 %v88, %v86
    %v90 = vsub.f32 %v65, %v72
    %v91 = vmul.f32 %v90, 1.442695
    %v92 = vpow.pop %v91
    %v93 = vsel %vm69, %v92, 0.0
    %94 = vadd.xlane.f32.xlu0 %v93
    %v95 = vpop.xlane.xlu0 %94
    %vm96 = vcmp.lt.f32.partialorder %v95, 20.0
    %v97 = vsel %vm69, %v66, -inf
    %98 = vmax.xlane.f32.xlu0 %v97
    %v99 = vpop.xlane.xlu0 %98
    %v100 = vsub.f32 %v66, %v99
    %v101 = vmul.f32 %v100, 1.442695
    %v102 = vpow.pop %v101
    %v103 = vsel %vm69, %v102, 0.0
    %104 = vadd.xlane.f32.xlu0 %v103
    %v105 = vpop.xlane.xlu0 %104
    %v106 = vlog2.pop %v105
    %v107 = vmul.f32 %v106, 0.6931472
    %vm108 = vcmp.eq.s32.totalorder %v68, %v89
    %v109 = vsel %vm108, %v100, 0.0
    %v110 = vsel %vm69, %v109, 0.0
    %111 = vadd.xlane.f32.xlu0 %v110
    %v112 = vpop.xlane.xlu0 %111
    %v113 = vsub.f32 %v107, %v112
    %v114 = vld [vmem:[#allocation2] sm:$0xff]
    %v115 = vsel %vm96, %v113, 0.0
    %v116 = vadd.f32 %v114, %v115
    %vm117 = vcmask 7168
    %118 = vst.msk [vmem:[#allocation2] sm:$0xff] %vm117, %v116
    %v119 = vld [vmem:[#allocation3] sm:$0xff]
    %v120 = vsel %vm96, 1, 0
    %v121 = vcvt.s32.f32 %v120
    %v122 = vadd.f32 %v119, %v121
    %123 = vst.msk [vmem:[#allocation3] sm:$0xff] %vm117, %v122
    %v124 = vld [vmem:[#allocation7] sm:$0xff]
    %v125 = vld [vmem:[%s3] sm:$0xff]
    %v126 = vsel %vm69, %v124, -inf
    %127 = vmax.xlane.f32.xlu0 %v126
    %v128 = vpop.xlane.xlu0 %127
    %vm129 = vcmp.eq.f32.partialorder %v124, %v128
    %v130 = vsel %vm129, %v68, 32
    %v131 = vsel %vm69, %v130, 2147483647
    %v132 = vand.u32 %v131, 65535
    %v133 = vshra.s32 %v131, 16
    %v134 = vcvt.s32.f32 %v132
    %v135 = vcvt.s32.f32 %v133
    %136 = vmin.xlane.f32.xlu0 %v135
    %v137 = vpop.xlane.xlu0 %136
    %vm138 = vcmp.eq.f32.partialorder %v135, %v137
    %v139 = vsel %vm138, %v134, inf
    %140 = vmin.xlane.f32.xlu0 %v139
    %v141 = vpop.xlane.xlu0 %140
    %v142 = vcvt.f32.s32 %v141
    %v143 = vcvt.f32.s32 %v137
    %v144 = vshll.u32 %v143, 16
    %v145 = vadd.s32 %v144, %v142
    %v146 = vsub.f32 %v124, %v128
    %v147 = vmul.f32 %v146, 1.442695
    %v148 = vpow.pop %v147
    %v149 = vsel %vm69, %v148, 0.0
    %150 = vadd.xlane.f32.xlu0 %v149
    %v151 = vpop.xlane.xlu0 %150
    %vm152 = vcmp.lt.f32.partialorder %v151, 20.0
    %v153 = vsel %vm69, %v125, -inf
    %154 = vmax.xlane.f32.xlu0 %v153
    %v155 = vpop.xlane.xlu0 %154
    %v156 = vsub.f32 %v125, %v155
    %v157 = vmul.f32 %v156, 1.442695
    %v158 = vpow.pop %v157
    %v159 = vsel %vm69, %v158, 0.0
    %160 = vadd.xlane.f32.xlu0 %v159
    %v161 = vpop.xlane.xlu0 %160
    %v162 = vlog2.pop %v161
    %v163 = vmul.f32 %v162, 0.6931472
    %vm164 = vcmp.eq.s32.totalorder %v68, %v145
    %v165 = vsel %vm164, %v156, 0.0
    %v166 = vsel %vm69, %v165, 0.0
    %167 = vadd.xlane.f32.xlu0 %v166
    %v168 = vpop.xlane.xlu0 %167
    %v169 = vsub.f32 %v163, %v168
    %s170 = scalar_lea.vmem [#allocation2], 8
    %v171 = vld [vmem:[%s170] sm:$0xff]
    %v172 = vsel %vm152, %v169, 0.0
    %v173 = vadd.f32 %v171, %v172
    %174 = vst.msk [vmem:[%s170] sm:$0xff] %vm117, %v173
    %s175 = scalar_lea.vmem [#allocation3], 8
    %v176 = vld [vmem:[%s175] sm:$0xff]
    %v177 = vsel %vm152, 1, 0
    %v178 = vcvt.s32.f32 %v177
    %v179 = vadd.f32 %v176, %v178
    %180 = vst.msk [vmem:[%s175] sm:$0xff] %vm117, %v179
    // Predicated region
    $region34: #{tpu_custom_call.1} parent=1 // pred_check
      %p181 = pneg %p56
    $region35: #{tpu_custom_call.1} parent=1 // pred_check_branch
      %183 = sbr.rel (%p181) target = $region37
    $region36: #{tpu_custom_call.1} parent=1 // pred_region
      %v184 = vld [vmem:[#allocation2] sm:$0xff]
      %v185 = vsel %vm117, %v184, 0.0
      %186 = vadd.xlane.f32.xlu0 %v185
      %v187 = vpop.xlane.xlu0 %186
      %v188 = vrot.slane %v187, 4
      %v189 = vadd.f32 %v187, %v188
      %v190 = vrot.slane %v189, 2
      %v191 = vadd.f32 %v189, %v190
      %v192 = vrot.slane %v191, 1
      %v193 = vadd.f32 %v191, %v192
      %s194 = vtos %v193
      %v195 = vld [vmem:[#allocation3] sm:$0xff]
      %v196 = vsel %vm117, %v195, 0.0
      %197 = vadd.xlane.f32.xlu0 %v196
      %v198 = vpop.xlane.xlu0 %197
      %v199 = vrot.slane %v198, 4
      %v200 = vadd.f32 %v198, %v199
      %v201 = vrot.slane %v200, 2
      %v202 = vadd.f32 %v200, %v201
      %v203 = vrot.slane %v202, 1
      %v204 = vadd.f32 %v202, %v203
      %s205 = vtos %v204
      %v206 = vstv %s205
      %v207 = vrcp.pop %v206
      %s208 = vtos %v207
      %s209 = smul.f32 %s194, %s208
      %v210 = vstv %s209
      %211 = vst [vmem:[#allocation10] sm:$0x1] %v210
      %v212 = vstv %s205
      %213 = vst [vmem:[#allocation11] sm:$0x1] %v212
      %v214 = vld [vmem:[%s170] sm:$0xff]
      %v215 = vsel %vm117, %v214, 0.0
      %216 = vadd.xlane.f32.xlu0 %v215
      %v217 = vpop.xlane.xlu0 %216
      %v218 = vrot.slane %v217, 4
      %v219 = vadd.f32 %v217, %v218
      %v220 = vrot.slane %v219, 2
      %v221 = vadd.f32 %v219, %v220
      %v222 = vrot.slane %v221, 1
      %v223 = vadd.f32 %v221, %v222
      %s224 = vtos %v223
      %v225 = vld [vmem:[%s175] sm:$0xff]
      %v226 = vsel %vm117, %v225, 0.0
      %227 = vadd.xlane.f32.xlu0 %v226
      %v228 = vpop.xlane.xlu0 %227
      %v229 = vrot.slane %v228, 4
      %v230 = vadd.f32 %v228, %v229
      %v231 = vrot.slane %v230, 2
      %v232 = vadd.f32 %v230, %v231
      %v233 = vrot.slane %v232, 1
      %v234 = vadd.f32 %v232, %v233
      %s235 = vtos %v234
      %v236 = vstv %s235
      %v237 = vrcp.pop %v236
      %s238 = vtos %v237
      %s239 = smul.f32 %s224, %s238
      %v240 = vstv %s239
      %241 = vst [vmem:[#allocation10 + $0x1] sm:$0x1] %v240
      %v242 = vstv %s235
      %243 = vst [vmem:[#allocation11 + $0x1] sm:$0x1] %v242
    $region37: #{tpu_custom_call.1} parent=1 // pred_fallthru
      _
    // Predicated region
    $region38: #{tpu_custom_call.1} parent=1 // pred_check
      _
    $region39: #{tpu_custom_call.1} parent=1 // pred_check_branch
      %245 = sbr.rel (0) target = $region41
    $region40: #{tpu_custom_call.1} parent=1 // pred_region
      %s247 = ssub.s32 32, 32
      %248 = vsyncadd [#allocation6], %s247
      %s250 = sshll.u32 [#allocation10], 4
      %s251 = int_to_ptr.vmem [resolvable:$true] %s250
      %253 = dma.vmem_to_hbm [thread:$0]  %s251, 32, %s4, [#allocation6]
    $region41: #{tpu_custom_call.1} parent=1 // pred_fallthru
      _
    // Predicated region
    $region42: #{tpu_custom_call.1} parent=1 // pred_check
      _
    $region43: #{tpu_custom_call.1} parent=1 // pred_check_branch
      %255 = sbr.rel (0) target = $region45
    $region44: #{tpu_custom_call.1} parent=1 // pred_region
      %s257 = ssub.s32 32, 32
      %258 = vsyncadd [#allocation12], %s257
      %s260 = sshll.u32 [#allocation11], 4
      %s261 = int_to_ptr.vmem [resolvable:$true] %s260
      %263 = dma.vmem_to_hbm [thread:$0]  %s261, 32, %s5, [#allocation12]
    $region45: #{tpu_custom_call.1} parent=1 // pred_fallthru
      _
    // Predicated region
    $region46: #{tpu_custom_call.1} parent=1 // pred_check
      _
    $region47: #{tpu_custom_call.1} parent=1 // pred_check_branch
      %265 = sbr.rel (0) target = $region49
    $region48: #{tpu_custom_call.1} parent=1 // pred_region
      %266 = dma.done [#allocation6], 32
    $region49: #{tpu_custom_call.1} parent=1 // pred_fallthru
      _
    // Predicated region
    $region50: #{tpu_custom_call.1} parent=1 // pred_check
      _
    $region51: #{tpu_custom_call.1} parent=1 // pred_check_branch
      %268 = sbr.rel (0) target = $region53
    $region52: #{tpu_custom_call.1} parent=1 // pred_region
      %269 = dma.done [#allocation12], 32
    $region53: #{tpu_custom_call.1} parent=1 // pred_fallthru
      _
    %270 = vsyncpa [#allocation5], 1
    %271 = vsyncpa [#allocation8], 1
    %272 = vsyncpa [#allocation6], 1
    %273 = vsyncpa [#allocation12], 1

</llo_original>
